<compile_context>
chip_gen: v6e
topology: v6e:2x2x1
jax: 0.10.0
libtpu: 0.0.40
codegen_flags: <defaults>
</compile_context>

<pallas_src>
import jax
import jax.numpy as jnp
from jax.experimental import pallas as pl
from jax.experimental.pallas import tpu as pltpu


def _nlinear_kernel(x_ref, w_ref, b_ref, o_ref):
    # x_ref: (TB, L, TC)   time on sublanes, channels on lanes
    # w_ref: (P, L)        nn.Linear weight [pred_len, seq_len]   (resident)
    # b_ref: (P, 1)        bias, f32                              (resident)
    # o_ref: (TB, P, TC)
    w = w_ref[...]
    b = b_ref[...]
    tb = x_ref.shape[0]
    for i in range(tb):                       # static unroll over the batch tile
        xb = x_ref[i]                         # (L, TC)
        last = xb[-1:, :]                     # (1, TC) per-series seq_last
        y = jnp.dot(w, xb - last, preferred_element_type=jnp.float32)   # MXU
        o_ref[i] = (y + b + last.astype(jnp.float32)).astype(o_ref.dtype)


def _vmem_budget():
    """(vmem_limit_bytes, tile_budget_bytes) sized for the local TPU generation."""
    try:
        cap = int(pltpu.get_tpu_info().vmem_capacity_bytes)
    except Exception:
        cap = 64 << 20                        # conservative fallback: v7x (64 MiB)
    limit = min(int(cap * 0.75), 110 << 20)   # ~48 MiB on v7x, ~96 MiB on v5e/v6e
    budget = int(limit * 0.6)                 # headroom for resident W/bias + scratch
    return limit, budget


def _pick_tiles(B, L, P, c_pad, in_bytes, out_bytes, budget):
    """TC: multiple-of-128 divisor of c_pad; TB: divisor of B; both fit budget."""
    per_lane = 2 * (L * in_bytes + P * out_bytes)   # double-buffered x+out, per lane
    k = c_pad // 128
    tc = 128
    for d in range(1, k + 1):
        cand = 128 * d
        if k % d == 0 and cand <= 2048 and cand * per_lane <= budget:
            tc = cand
    tb = 1
    for d in range(1, min(B, 32) + 1):
        if B % d == 0 and d * tc * per_lane <= budget:
            tb = d
    # Keep >= 2 total grid steps where possible so both v7x TensorCores get work.
    nc = c_pad // tc
    while tb > 1 and (B // tb) * nc < 2:
        tb -= 1
        while B % tb != 0:
            tb -= 1
    return tb, tc


def lstf_nlinear(x, weight, bias):
    """x: [B, seq_len, C], weight: [pred_len, seq_len], bias: [pred_len]."""
    B, L, C = x.shape
    P = weight.shape[0]

    # Lane-dense output: pad channels to a multiple of 128 (sliced off at the end).
    # TODO(synk): for very small C (< ~32) a one-time [B,L,C] -> [L, B*C] batch-fold
    # relayout would use lanes better than zero-padding.
    c_pad = ((C + 127) // 128) * 128
    x_in = jnp.pad(x, ((0, 0), (0, 0), (0, c_pad - C))) if c_pad != C else x

    in_bytes = jnp.dtype(x.dtype).itemsize
    out_bytes = in_bytes
    vmem_limit, budget = _vmem_budget()
    TB, TC = _pick_tiles(B, L, P, c_pad, in_bytes, out_bytes, budget)
    NB, NC = B // TB, c_pad // TC

    bias2 = bias.astype(jnp.float32).reshape(P, 1)

    cost = pl.CostEstimate(
        flops=2 * B * c_pad * L * P,
        transcendentals=0,
        bytes_accessed=(in_bytes * B * L * c_pad
                        + out_bytes * B * P * c_pad
                        + 4 * (P * L + P)),
    )

    out = pl.pallas_call(
        _nlinear_kernel,
        out_shape=jax.ShapeDtypeStruct((B, P, c_pad), x.dtype),
        grid=(NB, NC),
        in_specs=[
            pl.BlockSpec((TB, L, TC), lambda b, c: (b, 0, c)),   # x tile (streams)
            pl.BlockSpec((P, L), lambda b, c: (0, 0)),           # weight (resident)
            pl.BlockSpec((P, 1), lambda b, c: (0, 0)),           # bias   (resident)
        ],
        out_specs=pl.BlockSpec((TB, P, TC), lambda b, c: (b, 0, c)),
        compiler_params=pltpu.CompilerParams(
            dimension_semantics=("parallel", "parallel"),
            vmem_limit_bytes=vmem_limit,
        ),
        cost_estimate=cost,
    )(x_in, weight, bias2)

    return out[:, :, :C] if c_pad != C else out


def _reference(x, weight, bias):
    seq_last = x[:, -1:, :]
    xc = x - seq_last
    y = jnp.einsum("blc,pl->bpc", xc, weight) + bias[None, :, None]
    return y + seq_last


if __name__ == "__main__":
    B, seq_len, pred_len, C = 2, 8, 16, 4

    key = jax.random.PRNGKey(0)
    kx, kw, kb = jax.random.split(key, 3)

    # Deterministic nn.Linear-style init: U(-1/sqrt(seq_len), 1/sqrt(seq_len))
    bound = 1.0 / (seq_len ** 0.5)
    weight = jax.random.uniform(kw, (pred_len, seq_len), jnp.float32, -bound, bound)
    bias = jax.random.uniform(kb, (pred_len,), jnp.float32, -bound, bound)

    x = jax.random.normal(kx, (B, seq_len, C), jnp.float32)

    out = jax.block_until_ready(lstf_nlinear(x, weight, bias))
    ref = _reference(x, weight, bias)

    assert out.shape == (B, pred_len, C)
    assert jnp.allclose(out, ref, atol=1e-5, rtol=1e-5)

    print("KERNEL_OK")
</pallas_src>

<mosaic_0001>
module attributes {stable_mosaic.version = 11 : i64} {
  func.func @_nlinear_kernel(%arg0: i32, %arg1: i32, %arg2: memref<1x8x128xf32, #tpu.memory_space<vmem>>, %arg3: memref<16x8xf32, #tpu.memory_space<vmem>>, %arg4: memref<16x1xf32, #tpu.memory_space<vmem>>, %arg5: memref<1x16x128xf32, #tpu.memory_space<vmem>>) attributes {dimension_semantics = [#tpu.dimension_semantics<parallel>, #tpu.dimension_semantics<parallel>], iteration_bounds = array<i64: 2, 1>, scalar_prefetch = 0 : i64, scratch_operands = 0 : i64, tpu.core_type = #tpu.core_type<tc>, window_params = [{transform_indices = @transform_0, window_bounds = array<i64: 1, 8, 128>}, {pipeline_mode = #tpu.pipeline_mode<synchronous>, transform_indices = @transform_1, window_bounds = array<i64: 16, 8>}, {pipeline_mode = #tpu.pipeline_mode<synchronous>, transform_indices = @transform_2, window_bounds = array<i64: 16, 1>}, {transform_indices = @transform_3, window_bounds = array<i64: 1, 16, 128>}]} {
    %c0 = arith.constant 0 : index
    %c0_0 = arith.constant 0 : index
    %0 = vector.load %arg3[%c0, %c0_0] : memref<16x8xf32, #tpu.memory_space<vmem>>, vector<16x8xf32>
    %c0_1 = arith.constant 0 : index
    %c0_2 = arith.constant 0 : index
    %1 = vector.load %arg4[%c0_1, %c0_2] : memref<16x1xf32, #tpu.memory_space<vmem>>, vector<16x1xf32>
    %c0_3 = arith.constant 0 : index
    %c0_4 = arith.constant 0 : index
    %c0_5 = arith.constant 0 : index
    %2 = vector.load %arg2[%c0_3, %c0_4, %c0_5] : memref<1x8x128xf32, #tpu.memory_space<vmem>>, vector<1x8x128xf32>
    %3 = vector.shape_cast %2 : vector<1x8x128xf32> to vector<8x128xf32>
    %4 = vector.extract_strided_slice %3 {offsets = [7, 0], sizes = [1, 128], strides = [1, 1]} : vector<8x128xf32> to vector<1x128xf32>
    %5 = vector.broadcast %4 : vector<1x128xf32> to vector<8x128xf32>
    %6 = arith.subf %3, %5 : vector<8x128xf32>
    %cst = arith.constant dense<0.000000e+00> : vector<16x128xf32>
    %7 = tpu.matmul %0, %6, %cst {dimension_numbers = #tpu.dot_dimension_numbers<[1], [0], [0], [1], [0, 0, 1, 1], [], []>} : vector<16x8xf32>, vector<8x128xf32>, vector<16x128xf32> -> vector<16x128xf32>
    %8 = vector.broadcast %1 : vector<16x1xf32> to vector<16x128xf32>
    %9 = arith.addf %7, %8 : vector<16x128xf32>
    %10 = vector.broadcast %4 : vector<1x128xf32> to vector<16x128xf32>
    %11 = arith.addf %9, %10 : vector<16x128xf32>
    %c0_6 = arith.constant 0 : index
    %c0_7 = arith.constant 0 : index
    %c0_8 = arith.constant 0 : index
    %12 = vector.load %arg5[%c0_6, %c0_7, %c0_8] : memref<1x16x128xf32, #tpu.memory_space<vmem>>, vector<1x16x128xf32>
    %13 = vector.shape_cast %12 : vector<1x16x128xf32> to vector<16x128xf32>
    %14 = vector.shape_cast %11 : vector<16x128xf32> to vector<1x16x128xf32>
    tpu.vector_store %arg5[%c0_6, %c0_7, %c0_8], %14 {strides = array<i32>} : memref<1x16x128xf32, #tpu.memory_space<vmem>>, vector<1x16x128xf32>,
    return
  }
  func.func @transform_0(%arg0: i32, %arg1: i32) -> (i32, i32, i32) {
    %c0_i32 = arith.constant 0 : i32
    %c0_i32_0 = arith.constant 0 : i32
    return %arg0, %c0_i32, %arg1 : i32, i32, i32
  }
  func.func @transform_1(%arg0: i32, %arg1: i32) -> (i32, i32) {
    %c0_i32 = arith.constant 0 : i32
    %c0_i32_0 = arith.constant 0 : i32
    %c0_i32_1 = arith.constant 0 : i32
    return %c0_i32, %c0_i32_0 : i32, i32
  }
  func.func @transform_2(%arg0: i32, %arg1: i32) -> (i32, i32) {
    %c0_i32 = arith.constant 0 : i32
    %c0_i32_0 = arith.constant 0 : i32
    %c0_i32_1 = arith.constant 0 : i32
    return %c0_i32, %c0_i32_0 : i32, i32
  }
  func.func @transform_3(%arg0: i32, %arg1: i32) -> (i32, i32, i32) {
    %c0_i32 = arith.constant 0 : i32
    %c0_i32_0 = arith.constant 0 : i32
    return %arg0, %c0_i32, %arg1 : i32, i32, i32
  }
}

</mosaic_0001>

<llo_original>
// kernel: tpu_custom_call.1
$region0: #{tpu_custom_call.1}
  #allocation0 [shape = 'u32[]', space=smem, size = 0x4, offset = 0x4, fixed_abs, tag = 'smem constant byte address 0x4 - core index']
  #allocation1 [shape = 'u32[144,128]{1,0:T(1,128)}', space=vmem, size = 0x12000, scoped, tag = 'internal scratch']
  %s0 = inlined_call_operand.vmem [shape: f32[2,8,128], index: 0, kind: input, shape index: {}]
  %s1 = inlined_call_operand.vmem [shape: f32[16,8], index: 1, kind: input, shape index: {}]
  %s2 = inlined_call_operand.vmem [shape: f32[16,1], index: 2, kind: input, shape index: {}]
  %s3 = inlined_call_operand.hbm [shape: f32[2,16,128], index: 3, kind: output, shape index: {}]
  %s4 = sld [smem:[#allocation0]]
  $region45: #{tpu_custom_call.1} parent=0
    _
  %s6 = ssub.s32 1, %s4
  %s7 = scalar_select 0, %s6, %s4
  $region1: #{tpu_custom_call.1} parent=0
    #allocation2 [shape = 'u8[16384]{0}', space=vmem, size = 0x4000, scoped, tag = 'output window, operand 0']
    #allocation3 [shape = 's32[2]{0}', space=sflag, size = 0x8, scoped, tag = 'scoped memory for tpu_custom_call.1']
    %8 = vsyncpa [#allocation3], 0
    %s9 = scalar_lea.sflag [#allocation3], 1
    %10 = vsyncpa %s9, 0
    loop: start=0, step=1, limit=4
    $region2: #{tpu_custom_call.1} parent=1 // loop_pre_header
      _
    $region3: #{tpu_custom_call.1} parent=1 // loop_header
      %s12 = sphi 0, %s16
      %p13 = scmp.ge.s32.totalorder %s12, 4
      %s19 = sphi 0, %s31
      %s20 = sphi 0, %s27
      %s21 = sphi 0, %s19
      %s22 = sphi 0, %s20
      %s23 = sphi 0, %s21
      %s24 = sphi 0, %s22
      %s36 = sphi 0, %s38
      %s39 = sphi 0, %s36
      %s40 = sphi 0, %s39
      %s56 = sphi 0, %s40
      %s60 = sphi 0, %s60
      %s62 = sphi 0, %s60
      %s63 = sphi 0, %s62
      %s77 = sphi 0, %s63
      %s81 = sphi 0, %s81
      %s83 = sphi 0, %s81
      %s84 = sphi 0, %s83
      %s98 = sphi 0, %s84
      %s106 = sphi 0, %s108
      %s109 = sphi 0, %s106
      %s110 = sphi 0, %s109
      %s126 = sphi 0, %s110
    $region4: #{tpu_custom_call.1} parent=1 // loop_header_branch
      %15 = sbr.rel (%p13) target = $region8
    $region5: #{tpu_custom_call.1} parent=1 // loop_body
      %s17 = ssub.s32 %s12, 1
      %s18 = ssub.s32 %s12, 2
      %s25 = sadd.s32 1, %s20
      %p26 = scmp.ge.s32.totalorder %s25, 1
      %s27 = scalar_select %p26, 0, %s25
      %s28 = sadd.s32 1, %s19
      %s29 = scalar_select %p26, %s28, %s19
      %p30 = scmp.ge.s32.totalorder %s29, 2
      %s31 = scalar_select %p30, 0, %s29
      %s32 = ssub.s32 %s19, %s31
      %s33 = ssub.s32 %s20, %s27
      %s34 = sor.u32 %s32, %s33
      %p35 = scmp.eq.s32.totalorder %s34, 0
      %s37 = sadd.s32 %s36, 1
      %s38 = scalar_select %p35, %s36, %s37
      %p41 = pneg %p35
      %p42 = scmp.eq.s32.totalorder %s12, 1
      %p43 = por %p41, %p42
      %p44 = scmp.ne.s32.totalorder %s36, %s39
      %p45 = scmp.eq.s32.totalorder %s12, 0
      %p46 = por %p44, %p45
      %p47 = scmp.ne.s32.totalorder %s36, %s39
      %p48 = scmp.eq.s32.totalorder %s17, 1
      %p49 = por %p47, %p48
      %p50 = scmp.ne.s32.totalorder %s39, %s40
      %p51 = scmp.eq.s32.totalorder %s17, 0
      %p52 = por %p50, %p51
      %p53 = scmp.ne.s32.totalorder %s39, %s40
      %p54 = scmp.eq.s32.totalorder %s18, 1
      %p55 = por %p53, %p54
      %p57 = scmp.ne.s32.totalorder %s40, %s56
      %p58 = scmp.eq.s32.totalorder %s18, 0
      %p59 = por %p57, %p58
      %s61 = sadd.s32 %s60, 1
      %p64 = scmp.eq.s32.totalorder %s12, 1
      %p65 = scmp.ne.s32.totalorder %s60, %s62
      %p66 = scmp.eq.s32.totalorder %s12, 0
      %p67 = por %p65, %p66
      %p68 = scmp.ne.s32.totalorder %s60, %s62
      %p69 = scmp.eq.s32.totalorder %s17, 1
      %p70 = por %p68, %p69
      %p71 = scmp.ne.s32.totalorder %s62, %s63
      %p72 = scmp.eq.s32.totalorder %s17, 0
      %p73 = por %p71, %p72
      %p74 = scmp.ne.s32.totalorder %s62, %s63
      %p75 = scmp.eq.s32.totalorder %s18, 1
      %p76 = por %p74, %p75
      %p78 = scmp.ne.s32.totalorder %s63, %s77
      %p79 = scmp.eq.s32.totalorder %s18, 0
      %p80 = por %p78, %p79
      %s82 = sadd.s32 %s81, 1
      %p85 = scmp.eq.s32.totalorder %s12, 1
      %p86 = scmp.ne.s32.totalorder %s81, %s83
      %p87 = scmp.eq.s32.totalorder %s12, 0
      %p88 = por %p86, %p87
      %p89 = scmp.ne.s32.totalorder %s81, %s83
      %p90 = scmp.eq.s32.totalorder %s17, 1
      %p91 = por %p89, %p90
      %p92 = scmp.ne.s32.totalorder %s83, %s84
      %p93 = scmp.eq.s32.totalorder %s17, 0
      %p94 = por %p92, %p93
      %p95 = scmp.ne.s32.totalorder %s83, %s84
      %p96 = scmp.eq.s32.totalorder %s18, 1
      %p97 = por %p95, %p96
      %p99 = scmp.ne.s32.totalorder %s84, %s98
      %p100 = scmp.eq.s32.totalorder %s18, 0
      %p101 = por %p99, %p100
      %s102 = ssub.s32 %s19, %s31
      %s103 = ssub.s32 %s20, %s27
      %s104 = sor.u32 %s102, %s103
      %p105 = scmp.eq.s32.totalorder %s104, 0
      %s107 = sadd.s32 %s106, 1
      %s108 = scalar_select %p105, %s106, %s107
      %p111 = pneg %p105
      %p112 = scmp.eq.s32.totalorder %s12, 1
      %p113 = por %p111, %p112
      %p114 = scmp.ne.s32.totalorder %s106, %s109
      %p115 = scmp.eq.s32.totalorder %s12, 0
      %p116 = por %p114, %p115
      %p117 = scmp.ne.s32.totalorder %s106, %s109
      %p118 = scmp.eq.s32.totalorder %s17, 1
      %p119 = por %p117, %p118
      %p120 = scmp.ne.s32.totalorder %s109, %s110
      %p121 = scmp.eq.s32.totalorder %s17, 0
      %p122 = por %p120, %p121
      %p123 = scmp.ne.s32.totalorder %s109, %s110
      %p124 = scmp.eq.s32.totalorder %s18, 1
      %p125 = por %p123, %p124
      %p127 = scmp.ne.s32.totalorder %s110, %s126
      %p128 = scmp.eq.s32.totalorder %s18, 0
      %p129 = por %p127, %p128
      %p130 = scmp.le.s32.totalorder 1, %s12
      %p131 = scmp.lt.s32.totalorder %s12, 3
      %p132 = pnand %p130, %p131
      %p133 = pneg %p132
      // Predicated region
      $region9: #{tpu_custom_call.1} parent=5 // pred_check
        _
      $region10: #{tpu_custom_call.1} parent=5 // pred_check_branch
        %135 = sbr.rel (%p132) target = $region12
      $region11: #{tpu_custom_call.1} parent=5 // pred_region
        %s136 = ssub.s32 %s12, 1
        // Predicated region
        $region13: #{tpu_custom_call.1} parent=11 // pred_check
          %p137 = pneg %p73
        $region14: #{tpu_custom_call.1} parent=11 // pred_check_branch
          %139 = sbr.rel (%p137) target = $region16
        $region15: #{tpu_custom_call.1} parent=11 // pred_region
          _
        $region16: #{tpu_custom_call.1} parent=11 // pred_fallthru
          _
        // Predicated region
        $region17: #{tpu_custom_call.1} parent=11 // pred_check
          %p140 = pneg %p94
        $region18: #{tpu_custom_call.1} parent=11 // pred_check_branch
          %142 = sbr.rel (%p140) target = $region20
        $region19: #{tpu_custom_call.1} parent=11 // pred_region
          _
        $region20: #{tpu_custom_call.1} parent=11 // pred_fallthru
          _
      $region12: #{tpu_custom_call.1} parent=5 // pred_fallthru
        _
      %p143 = scmp.lt.s32.totalorder %s12, 2
      // Predicated region
      $region21: #{tpu_custom_call.1} parent=5 // pred_check
        %p144 = pneg %p143
      $region22: #{tpu_custom_call.1} parent=5 // pred_check_branch
        %146 = sbr.rel (%p144) target = $region24
      $region23: #{tpu_custom_call.1} parent=5 // pred_region
        // Predicated region
        $region25: #{tpu_custom_call.1} parent=23 // pred_check
          %p147 = pneg %p46
        $region26: #{tpu_custom_call.1} parent=23 // pred_check_branch
          %149 = sbr.rel (%p147) target = $region28
        $region27: #{tpu_custom_call.1} parent=23 // pred_region
          %p150 = scmp.lt.s32.totalorder %s19, 1
          %s151 = scalar_select %p150, %s19, 1
          %p152 = scmp.lt.s32.totalorder %s20, 0
          %s153 = scalar_select %p152, %s20, 0
          %s154 = sadd.s32 %s153, %s151
          %s155 = smul.addr %s154, 8
          %s156 = scalar_lea.vmem %s0, %s155
        $region28: #{tpu_custom_call.1} parent=23 // pred_fallthru
          _
      $region24: #{tpu_custom_call.1} parent=5 // pred_fallthru
        _
      %p157 = scmp.le.s32.totalorder 1, %s12
      %p158 = scmp.lt.s32.totalorder %s12, 3
      %p159 = pnand %p157, %p158
      %p160 = pneg %p159
      // Predicated region
      $region29: #{tpu_custom_call.1} parent=5 // pred_check
        _
      $region30: #{tpu_custom_call.1} parent=5 // pred_check_branch
        %162 = sbr.rel (%p159) target = $region32
      $region31: #{tpu_custom_call.1} parent=5 // pred_region
        %s163 = ssub.s32 %s12, 1
        %p164 = scmp.lt.s32.totalorder %s21, 1
        %s165 = scalar_select %p164, %s21, 1
        %p166 = scmp.lt.s32.totalorder %s22, 0
        %s167 = scalar_select %p166, %s22, 0
        %s168 = sadd.s32 %s167, %s165
        %s169 = smul.addr %s168, 8
        %s170 = scalar_lea.vmem %s0, %s169
        %p171 = pneg %p52
        %p172 = pneg %p49
        %p173 = pneg %p73
        %p174 = pneg %p70
        %p175 = pneg %p94
        %p176 = pneg %p91
        %p177 = pneg %p122
        %p178 = pneg %p119
        %s179 = sand.u32 %s109, 1
        %s180 = scalar_lea.sflag [#allocation3], %s179
        %s181 = sand.u32 %s109, 1
        %s182 = smul.addr %s181, 16
        %s183 = scalar_lea.vmem [#allocation2], %s182
        %p184 = scmp.lt.s32.totalorder %s21, 1
        %s185 = scalar_select %p184, %s21, 1
        %p186 = scmp.lt.s32.totalorder %s22, 0
        %s187 = scalar_select %p186, %s22, 0
        %s188 = sadd.s32 %s187, %s185
        %s189 = smul.addr %s188, 8
        %s190 = scalar_lea.vmem %s0, %s189
        %v191 = vld [vmem:[%s1] sm:$0xff]
        %v192 = vld [vmem:[%s1 + $0x8] sm:$0xff]
        %v193 = vld [vmem:[%s2] sm:$0xff]
        %v194 = vld [vmem:[%s2 + $0x8] sm:$0xff]
        %v195 = vld [vmem:[%s190] sm:$0xff]
        %v196 = vlaneseq
        %v197 = vshrl.u32 %v196, 7
        %v198 = vsub.s32 7, %v197
        %v199 = vrot.slane %v195, %v198
        %v200 = vsub.f32 %v195, %v199
        %202 = vset.pattern.permute.xlu0 0
        %203 = vperm.xlu0 %202, %v193
        %v204 = vpop.permute.xlu0 %203
        %207 = vset.pattern.permute.xlu0 0
        %208 = vperm.xlu0 %207, %v194
        %v209 = vpop.permute.xlu0 %208
        %vm211 = vcmask 64512
        %v213 = vsel %vm211, %v191, 0
        %v216 = vsel %vm211, %v192, 0
        %218 = vmatprep.subr.mxu0 0.0
        %219 = vmatpush1.msra.mxu0 0.0
        %220 = vmatprep.subr.mxu0 0.0
        %221 = vmatpush1.msra.mxu0 0.0
        %222 = vmatprep.subr.mxu0 0.0
        %223 = vmatpush1.msra.mxu0 0.0
        %224 = vmatprep.subr.mxu0 0.0
        %225 = vmatpush1.msra.mxu0 0.0
        %226 = vmatprep.subr.mxu0 0.0
        %227 = vmatpush1.msra.mxu0 0.0
        %228 = vmatprep.subr.mxu0 0.0
        %229 = vmatpush1.msra.mxu0 0.0
        %230 = vmatprep.subr.mxu0 0.0
        %231 = vmatpush1.msra.mxu0 0.0
        %232 = vmatprep.subr.mxu0 0.0
        %233 = vmatpush1.msra.mxu0 0.0
        %234 = vmatprep.subr.mxu0 0.0
        %235 = vmatpush1.msra.mxu0 0.0
        %236 = vmatprep.subr.mxu0 0.0
        %237 = vmatpush1.msra.mxu0 0.0
        %238 = vmatprep.subr.mxu0 0.0
        %239 = vmatpush1.msra.mxu0 0.0
        %240 = vmatprep.subr.mxu0 0.0
        %241 = vmatpush1.msra.mxu0 0.0
        %242 = vmatprep.subr.mxu0 0.0
        %243 = vmatpush1.msra.mxu0 0.0
        %244 = vmatprep.subr.mxu0 0.0
        %245 = vmatpush1.msra.mxu0 0.0
        %246 = vmatprep.subr.mxu0 0.0
        %247 = vmatpush1.msra.mxu0 0.0
        %248 = vmatprep.subr.mxu0 0.0
        %249 = vmatpush1.msra.mxu0 %v200
        %250 = vmatprep.subr.mxu0 0.0
        %251 = vmatpush2.msra.mxu0 0.0
        %252 = vmatprep.subr.mxu0 0.0
        %253 = vmatpush2.msra.mxu0 0.0
        %254 = vmatprep.subr.mxu0 0.0
        %255 = vmatpush2.msra.mxu0 0.0
        %256 = vmatprep.subr.mxu0 0.0
        %257 = vmatpush2.msra.mxu0 0.0
        %258 = vmatprep.subr.mxu0 0.0
        %259 = vmatpush2.msra.mxu0 0.0
        %260 = vmatprep.subr.mxu0 0.0
        %261 = vmatpush2.msra.mxu0 0.0
        %262 = vmatprep.subr.mxu0 0.0
        %263 = vmatpush2.msra.mxu0 0.0
        %264 = vmatprep.subr.mxu0 0.0
        %265 = vmatpush2.msra.mxu0 0.0
        %266 = vmatprep.subr.mxu0 0.0
        %267 = vmatpush2.msra.mxu0 0.0
        %268 = vmatprep.subr.mxu0 0.0
        %269 = vmatpush2.msra.mxu0 0.0
        %270 = vmatprep.subr.mxu0 0.0
        %271 = vmatpush2.msra.mxu0 0.0
        %272 = vmatprep.subr.mxu0 0.0
        %273 = vmatpush2.msra.mxu0 0.0
        %274 = vmatprep.subr.mxu0 0.0
        %275 = vmatpush2.msra.mxu0 0.0
        %276 = vmatprep.subr.mxu0 0.0
        %277 = vmatpush2.msra.mxu0 0.0
        %278 = vmatprep.subr.mxu0 0.0
        %279 = vmatpush2.msra.mxu0 0.0
        %280 = vmatprep.subr.mxu0 0.0
        %281 = vmatpush2.msra.mxu0 0.0
        %282 = vmatprep.mubr.f32.mxu0 0.0
        %283 = vmatmul.mubr.f32.gmra.mxu0 %v213
        %v284 = vpop.f32.mrf.mxu0
        %v285 = vadd.f32 %v204, %v284
        %v286 = vpop.f32.mrf.mxu0
        %287 = vmatprep.mubr.f32.mxu0 0.0
        %288 = vmatmul.mubr.f32.gmra.mxu0 %v216
        %v289 = vpop.f32.mrf.mxu0
        %v290 = vadd.f32 %v209, %v289
        %v291 = vpop.f32.mrf.mxu0
        %292 = vdwg.mxu0
        %v293 = vadd.f32 %v285, %v199
        %v294 = vadd.f32 %v290, %v199
        %295 = vst [vmem:[%s183] sm:$0xff] %v293
        %296 = vst [vmem:[%s183 + $0x8] sm:$0xff] %v294
        %s297 = sand.u32 %s109, 1
        %s298 = scalar_lea.sflag [#allocation3], %s297
        %s299 = sand.u32 %s109, 1
        %s300 = smul.addr %s299, 16
        %s301 = scalar_lea.vmem [#allocation2], %s300
        // Predicated region
        $region33: #{tpu_custom_call.1} parent=31 // pred_check
          %p302 = pneg %p119
        $region34: #{tpu_custom_call.1} parent=31 // pred_check_branch
          %304 = sbr.rel (%p302) target = $region36
        $region35: #{tpu_custom_call.1} parent=31 // pred_region
          %s306 = ssub.s32 256, 256
          %307 = vsyncadd %s298, %s306
          %s308 = smul.addr %s21, 2
          %s309 = sadd.s32 %s22, %s308
          %s310 = smul.addr %s309, 128
          %s311 = scalar_lea.hbm %s3, %s310
          %s312 = sshll.u32 %s301, 4
          %s313 = int_to_ptr.vmem [resolvable:$true] %s312
          %318 = dma.vmem_to_hbm [thread:$0]  %s313, 256, %s311, %s298, 128, 128, 8
        $region36: #{tpu_custom_call.1} parent=31 // pred_fallthru
          _
      $region32: #{tpu_custom_call.1} parent=5 // pred_fallthru
        _
      %p319 = scmp.le.s32.totalorder 2, %s12
      // Predicated region
      $region37: #{tpu_custom_call.1} parent=5 // pred_check
        %p320 = pneg %p319
      $region38: #{tpu_custom_call.1} parent=5 // pred_check_branch
        %322 = sbr.rel (%p320) target = $region40
      $region39: #{tpu_custom_call.1} parent=5 // pred_region
        %s323 = ssub.s32 %s12, 2
        // Predicated region
        $region41: #{tpu_custom_call.1} parent=39 // pred_check
          %p324 = pneg %p125
        $region42: #{tpu_custom_call.1} parent=39 // pred_check_branch
          %326 = sbr.rel (%p324) target = $region44
        $region43: #{tpu_custom_call.1} parent=39 // pred_region
          %s327 = sand.u32 %s110, 1
          %s328 = scalar_lea.sflag [#allocation3], %s327
          %s329 = sand.u32 %s110, 1
          %s330 = smul.addr %s329, 16
          %s331 = scalar_lea.vmem [#allocation2], %s330
          %332 = dma.done %s328, 256
        $region44: #{tpu_custom_call.1} parent=39 // pred_fallthru
          _
      $region40: #{tpu_custom_call.1} parent=5 // pred_fallthru
        _
    $region6: #{tpu_custom_call.1} parent=1 // loop_footer
      %s16 = sadd.s32 1, %s12
    $region7: #{tpu_custom_call.1} parent=1 // loop_footer_branch
      %11 = sbr.rel target = $region3
    $region8: #{tpu_custom_call.1} parent=1 // loop_exit
      _
    %333 = vsyncpa [#allocation3], 1
    %s334 = scalar_lea.sflag [#allocation3], 1
    %335 = vsyncpa %s334, 1

</llo_original>
